<compile_context>
chip_gen: v5e
topology: v5e:2x2
jax: 0.10.0
libtpu: 0.0.40
codegen_flags: <defaults>
</compile_context>

<pallas_src>
import math
import jax
import jax.numpy as jnp
import numpy as np
from jax.experimental import pallas as pl
from jax.experimental.pallas import tpu as pltpu

# ---------------- problem sizes (small, consistent with the module) ----------------
N = 8            # number of graph nodes
F_IN = 16        # in_channels
C = 32           # out_channels
H = 4            # heads
HC = H * C       # 128
HN = H * N       # 32
FA = F_IN + 1    # augmented feature width (ones column folds the biases)
BN_EPS = 1e-5
LEAKY_SLOPE = 0.01
MASK_VAL = -1e30


def transformer_block_kernel(x_blk_ref, mask_ref, w_qkv_ref, wproj_ref,
                             wskip_ref, gb_ref, out_ref):
    x_blk = x_blk_ref[...]               # (H*N, H*FA) = (32, 68), block-diag copies of [x|1]
    mask_add = mask_ref[...]             # (H*N, H*N): 0 where edge j->i (same head), -1e30 else

    # --- one MXU push -> head-major q|k|v as plain lane slices (no XLU repack) --------
    qkv = jnp.dot(x_blk, w_qkv_ref[...], preferred_element_type=jnp.float32)   # (32, 96)
    q_r = qkv[:, 0 * C:1 * C]            # (H*N, C): row h*N+i == (node i, head h)
    k_r = qkv[:, 1 * C:2 * C]
    v_r = qkv[:, 2 * C:3 * C]

    # --- all heads in one (32,32) score tile; transpose folded into the MXU push ------
    scale = 1.0 / math.sqrt(C)
    s = jax.lax.dot_general(q_r, k_r, (((1,), (1,)), ((), ())),
                            preferred_element_type=jnp.float32) * scale + mask_add
    m = jnp.max(s, axis=-1, keepdims=True)
    p = jnp.exp(s - m)                   # masked entries underflow to exactly 0
    denom = jnp.sum(p, axis=-1, keepdims=True)
    # NOTE: a target node with zero incoming edges would get uniform weights here
    # (PyG would propagate NaN); the test graph guarantees self-loops.
    p = p / jnp.maximum(denom, 1e-30)    # exact divide (tiny tile; approx not needed)
    attn_r = jnp.dot(p, v_r, preferred_element_type=jnp.float32)      # (H*N, C) head-major

    # --- projection folded over heads + folded skip branch; no inverse repack ---------
    # skip: (x @ wskip + bskip) @ wproj  ==  [x | 1] @ ([wskip; bskip] @ wproj)
    y = jnp.dot(x_blk[0:N, 0:FA], wskip_ref[...],
                preferred_element_type=jnp.float32)                   # (N, C)
    for h in range(H):                   # 4 tiny MXU pushes on aligned static slices
        y = y + jnp.dot(attn_r[h * N:(h + 1) * N, :],
                        wproj_ref[h * C:(h + 1) * C, :],
                        preferred_element_type=jnp.float32)
    # bproj is omitted: it is exactly cancelled by the batch-mean subtraction below.

    # --- BatchNorm1d (training mode: batch mean, biased var) + LeakyReLU --------------
    gamma = gb_ref[0:1, :]
    beta = gb_ref[1:2, :]
    mean = jnp.mean(y, axis=0, keepdims=True)
    var = jnp.mean((y - mean) ** 2, axis=0, keepdims=True)
    y = (y - mean) * jax.lax.rsqrt(var + BN_EPS) * gamma + beta
    out_ref[...] = jnp.where(y > 0, y, LEAKY_SLOPE * y)


@jax.jit
def transformer_block(x, edge_index, params):
    """x: (N, F_IN) f32; edge_index: (2, E) int32 with row0=source, row1=target."""
    hp = jax.lax.Precision.HIGHEST
    src, dst = edge_index[0], edge_index[1]
    adj = jnp.zeros((N, N), jnp.float32).at[dst, src].set(1.0)        # adj[i, j] = edge j->i
    block_adj = jnp.kron(jnp.eye(H, dtype=jnp.float32), adj)          # (H*N, H*N) block diag
    mask_add = jnp.where(block_adj > 0, 0.0, MASK_VAL).astype(jnp.float32)

    # head-major block-diagonal input: row h*N+i carries [x[i] | 1] in head-h columns.
    x_aug = jnp.concatenate([x, jnp.ones((N, 1), jnp.float32)], axis=1)     # (N, FA)
    x_blk = jnp.kron(jnp.eye(H, dtype=jnp.float32), x_aug)                  # (H*N, H*FA)

    # per-head-stacked [wq_h|wk_h|wv_h ; bq_h|bk_h|bv_h] blocks -> (H*FA, 3*C)
    head_blocks = []
    for h in range(H):
        sl = slice(h * C, (h + 1) * C)
        w_h = jnp.concatenate([params["wq"][:, sl], params["wk"][:, sl],
                               params["wv"][:, sl]], axis=1)                # (F_IN, 3C)
        b_h = jnp.concatenate([params["bq"][:, sl], params["bk"][:, sl],
                               params["bv"][:, sl]], axis=1)                # (1, 3C)
        head_blocks.append(jnp.concatenate([w_h, b_h], axis=0))             # (FA, 3C)
    w_qkv_blk = jnp.concatenate(head_blocks, axis=0)                        # (H*FA, 3C)

    # skip branch folded through the projection (bproj dropped: cancelled by train BN).
    wskip_proj = jnp.dot(jnp.concatenate([params["wskip"], params["bskip"]], axis=0),
                         params["wproj"], precision=hp)                     # (FA, C)

    gb = jnp.concatenate([params["gamma"], params["beta"]], axis=0)         # (2, C)

    args = (x_blk, mask_add, w_qkv_blk, params["wproj"], wskip_proj, gb)
    vmem = pl.BlockSpec(memory_space=pltpu.MemorySpace.VMEM)
    return pl.pallas_call(
        transformer_block_kernel,
        out_shape=jax.ShapeDtypeStruct((N, C), jnp.float32),
        in_specs=[vmem] * len(args),
        out_specs=vmem,
    )(*args)


def reference(x, edge_index, params):
    """Pure-JAX reference with identical math (different summation order)."""
    hp = jax.lax.Precision.HIGHEST
    src, dst = edge_index[0], edge_index[1]
    adj = jnp.zeros((N, N), jnp.float32).at[dst, src].set(1.0)
    q = jnp.dot(x, params["wq"], precision=hp) + params["bq"]
    k = jnp.dot(x, params["wk"], precision=hp) + params["bk"]
    v = jnp.dot(x, params["wv"], precision=hp) + params["bv"]
    qh = q.reshape(N, H, C)
    kh = k.reshape(N, H, C)
    vh = v.reshape(N, H, C)
    s = jnp.einsum("ihc,jhc->hij", qh, kh, precision=hp) / math.sqrt(C)     # (H, N, N)
    mask = (adj > 0)[None, :, :]
    s_m = jnp.where(mask, s, MASK_VAL)
    m = jnp.max(s_m, axis=-1, keepdims=True)
    p = jnp.where(mask, jnp.exp(s_m - m), 0.0)
    p = p / jnp.maximum(jnp.sum(p, axis=-1, keepdims=True), 1e-30)
    attn = jnp.einsum("hij,jhc->ihc", p, vh, precision=hp).reshape(N, HC)
    out = attn + (jnp.dot(x, params["wskip"], precision=hp) + params["bskip"])
    y = jnp.dot(out, params["wproj"], precision=hp) + params["bproj"]
    mean = jnp.mean(y, axis=0, keepdims=True)
    var = jnp.mean((y - mean) ** 2, axis=0, keepdims=True)
    y = (y - mean) / jnp.sqrt(var + BN_EPS) * params["gamma"] + params["beta"]
    return jnp.where(y > 0, y, LEAKY_SLOPE * y)


def init_params(key):
    ks = jax.random.split(key, 6)

    def lin(k, fan_in, fan_out):
        bound = 1.0 / math.sqrt(fan_in)
        kw, kb = jax.random.split(k)
        w = jax.random.uniform(kw, (fan_in, fan_out), jnp.float32, -bound, bound)
        b = jax.random.uniform(kb, (1, fan_out), jnp.float32, -bound, bound)
        return w, b

    wq, bq = lin(ks[0], F_IN, HC)
    wk, bk = lin(ks[1], F_IN, HC)
    wv, bv = lin(ks[2], F_IN, HC)
    wskip, bskip = lin(ks[3], F_IN, HC)
    wproj, bproj = lin(ks[4], HC, C)
    return dict(
        wq=wq, bq=bq, wk=wk, bk=bk, wv=wv, bv=bv,
        wskip=wskip, bskip=bskip, wproj=wproj, bproj=bproj,
        gamma=jnp.ones((1, C), jnp.float32),   # BatchNorm1d affine init
        beta=jnp.zeros((1, C), jnp.float32),
    )


if __name__ == "__main__":
    key = jax.random.PRNGKey(0)
    kx, kp = jax.random.split(key)

    x = jax.random.normal(kx, (N, F_IN), jnp.float32)

    # deterministic small graph: self-loop + ring edge (i-1 -> i) for every node,
    # so each target node has at least one incoming edge (as in typical PyG usage).
    src = np.concatenate([np.arange(N), (np.arange(N) - 1) % N]).astype(np.int32)
    dst = np.concatenate([np.arange(N), np.arange(N)]).astype(np.int32)
    edge_index = jnp.asarray(np.stack([src, dst], axis=0))       # (2, E)

    params = init_params(kp)

    out = transformer_block(x, edge_index, params)
    out = jax.block_until_ready(out)

    ref = reference(x, edge_index, params)
    assert out.shape == (N, C) and out.dtype == jnp.float32
    np.testing.assert_allclose(np.asarray(out), np.asarray(ref), rtol=1e-3, atol=1e-3)

    print("KERNEL_OK")
</pallas_src>

<mosaic_0001>
module attributes {stable_mosaic.version = 11 : i64} {
  func.func @transformer_block_kernel(%arg0: memref<32x68xf32, #tpu.memory_space<vmem>>, %arg1: memref<32x32xf32, #tpu.memory_space<vmem>>, %arg2: memref<68x96xf32, #tpu.memory_space<vmem>>, %arg3: memref<128x32xf32, #tpu.memory_space<vmem>>, %arg4: memref<17x32xf32, #tpu.memory_space<vmem>>, %arg5: memref<2x32xf32, #tpu.memory_space<vmem>>, %arg6: memref<8x32xf32, #tpu.memory_space<vmem>>) attributes {dimension_semantics = [], scalar_prefetch = 0 : i64, scratch_operands = 0 : i64, tpu.core_type = #tpu.core_type<tc>} {
    %c0 = arith.constant 0 : index
    %c0_0 = arith.constant 0 : index
    %0 = vector.load %arg0[%c0, %c0_0] : memref<32x68xf32, #tpu.memory_space<vmem>>, vector<32x68xf32>
    %c0_1 = arith.constant 0 : index
    %c0_2 = arith.constant 0 : index
    %1 = vector.load %arg1[%c0_1, %c0_2] : memref<32x32xf32, #tpu.memory_space<vmem>>, vector<32x32xf32>
    %c0_3 = arith.constant 0 : index
    %c0_4 = arith.constant 0 : index
    %2 = vector.load %arg2[%c0_3, %c0_4] : memref<68x96xf32, #tpu.memory_space<vmem>>, vector<68x96xf32>
    %cst = arith.constant dense<0.000000e+00> : vector<32x96xf32>
    %3 = tpu.matmul %0, %2, %cst {dimension_numbers = #tpu.dot_dimension_numbers<[1], [0], [0], [1], [0, 0, 1, 1], [], []>} : vector<32x68xf32>, vector<68x96xf32>, vector<32x96xf32> -> vector<32x96xf32>
    %4 = vector.extract_strided_slice %3 {offsets = [0, 0], sizes = [32, 32], strides = [1, 1]} : vector<32x96xf32> to vector<32x32xf32>
    %5 = vector.extract_strided_slice %3 {offsets = [0, 32], sizes = [32, 32], strides = [1, 1]} : vector<32x96xf32> to vector<32x32xf32>
    %6 = vector.extract_strided_slice %3 {offsets = [0, 64], sizes = [32, 32], strides = [1, 1]} : vector<32x96xf32> to vector<32x32xf32>
    %cst_5 = arith.constant dense<0.000000e+00> : vector<32x32xf32>
    %7 = tpu.matmul %4, %5, %cst_5 {dimension_numbers = #tpu.dot_dimension_numbers<[1], [1], [0], [0], [0, 0, 1, 0], [], []>} : vector<32x32xf32>, vector<32x32xf32>, vector<32x32xf32> -> vector<32x32xf32>
    %cst_6 = arith.constant 0.176776692 : f32
    %8 = vector.broadcast %cst_6 : f32 to vector<32x32xf32>
    %9 = arith.mulf %7, %8 : vector<32x32xf32>
    %10 = arith.addf %9, %1 : vector<32x32xf32>
    %cst_7 = arith.constant dense<0xFF800000> : vector<32xf32>
    %11 = vector.multi_reduction <maximumf>, %10, %cst_7 [1] : vector<32x32xf32> to vector<32xf32>
    %12 = vector.shape_cast %11 : vector<32xf32> to vector<32x1xf32>
    %13 = vector.broadcast %12 : vector<32x1xf32> to vector<32x32xf32>
    %14 = arith.subf %10, %13 : vector<32x32xf32>
    %15 = math.exp %14 : vector<32x32xf32>
    %cst_8 = arith.constant dense<0.000000e+00> : vector<32xf32>
    %16 = vector.multi_reduction <add>, %15, %cst_8 [1] : vector<32x32xf32> to vector<32xf32>
    %17 = vector.shape_cast %16 : vector<32xf32> to vector<32x1xf32>
    %cst_9 = arith.constant 1.000000e-30 : f32
    %18 = vector.broadcast %cst_9 : f32 to vector<32x1xf32>
    %19 = arith.maximumf %17, %18 : vector<32x1xf32>
    %20 = vector.broadcast %19 : vector<32x1xf32> to vector<32x32xf32>
    %21 = arith.divf %15, %20 : vector<32x32xf32>
    %cst_10 = arith.constant dense<0.000000e+00> : vector<32x32xf32>
    %22 = tpu.matmul %21, %6, %cst_10 {dimension_numbers = #tpu.dot_dimension_numbers<[1], [0], [0], [1], [0, 0, 1, 1], [], []>} : vector<32x32xf32>, vector<32x32xf32>, vector<32x32xf32> -> vector<32x32xf32>
    %23 = vector.extract_strided_slice %0 {offsets = [0, 0], sizes = [8, 17], strides = [1, 1]} : vector<32x68xf32> to vector<8x17xf32>
    %c0_11 = arith.constant 0 : index
    %c0_12 = arith.constant 0 : index
    %24 = vector.load %arg4[%c0_11, %c0_12] : memref<17x32xf32, #tpu.memory_space<vmem>>, vector<17x32xf32>
    %cst_13 = arith.constant dense<0.000000e+00> : vector<8x32xf32>
    %25 = tpu.matmul %23, %24, %cst_13 {dimension_numbers = #tpu.dot_dimension_numbers<[1], [0], [0], [1], [0, 0, 1, 1], [], []>} : vector<8x17xf32>, vector<17x32xf32>, vector<8x32xf32> -> vector<8x32xf32>
    %26 = vector.extract_strided_slice %22 {offsets = [0, 0], sizes = [8, 32], strides = [1, 1]} : vector<32x32xf32> to vector<8x32xf32>
    %c0_14 = arith.constant 0 : index
    %c0_15 = arith.constant 0 : index
    %27 = vector.load %arg3[%c0_14, %c0_15] : memref<128x32xf32, #tpu.memory_space<vmem>>, vector<32x32xf32>
    %cst_16 = arith.constant dense<0.000000e+00> : vector<8x32xf32>
    %28 = tpu.matmul %26, %27, %cst_16 {dimension_numbers = #tpu.dot_dimension_numbers<[1], [0], [0], [1], [0, 0, 1, 1], [], []>} : vector<8x32xf32>, vector<32x32xf32>, vector<8x32xf32> -> vector<8x32xf32>
    %29 = arith.addf %25, %28 : vector<8x32xf32>
    %30 = vector.extract_strided_slice %22 {offsets = [8, 0], sizes = [8, 32], strides = [1, 1]} : vector<32x32xf32> to vector<8x32xf32>
    %c32 = arith.constant 32 : index
    %c0_17 = arith.constant 0 : index
    %31 = vector.load %arg3[%c32, %c0_17] : memref<128x32xf32, #tpu.memory_space<vmem>>, vector<32x32xf32>
    %cst_18 = arith.constant dense<0.000000e+00> : vector<8x32xf32>
    %32 = tpu.matmul %30, %31, %cst_18 {dimension_numbers = #tpu.dot_dimension_numbers<[1], [0], [0], [1], [0, 0, 1, 1], [], []>} : vector<8x32xf32>, vector<32x32xf32>, vector<8x32xf32> -> vector<8x32xf32>
    %33 = arith.addf %29, %32 : vector<8x32xf32>
    %34 = vector.extract_strided_slice %22 {offsets = [16, 0], sizes = [8, 32], strides = [1, 1]} : vector<32x32xf32> to vector<8x32xf32>
    %c64 = arith.constant 64 : index
    %c0_19 = arith.constant 0 : index
    %35 = vector.load %arg3[%c64, %c0_19] : memref<128x32xf32, #tpu.memory_space<vmem>>, vector<32x32xf32>
    %cst_20 = arith.constant dense<0.000000e+00> : vector<8x32xf32>
    %36 = tpu.matmul %34, %35, %cst_20 {dimension_numbers = #tpu.dot_dimension_numbers<[1], [0], [0], [1], [0, 0, 1, 1], [], []>} : vector<8x32xf32>, vector<32x32xf32>, vector<8x32xf32> -> vector<8x32xf32>
    %37 = arith.addf %33, %36 : vector<8x32xf32>
    %38 = vector.extract_strided_slice %22 {offsets = [24, 0], sizes = [8, 32], strides = [1, 1]} : vector<32x32xf32> to vector<8x32xf32>
    %c96 = arith.constant 96 : index
    %c0_21 = arith.constant 0 : index
    %39 = vector.load %arg3[%c96, %c0_21] : memref<128x32xf32, #tpu.memory_space<vmem>>, vector<32x32xf32>
    %cst_22 = arith.constant dense<0.000000e+00> : vector<8x32xf32>
    %40 = tpu.matmul %38, %39, %cst_22 {dimension_numbers = #tpu.dot_dimension_numbers<[1], [0], [0], [1], [0, 0, 1, 1], [], []>} : vector<8x32xf32>, vector<32x32xf32>, vector<8x32xf32> -> vector<8x32xf32>
    %41 = arith.addf %37, %40 : vector<8x32xf32>
    %c0_23 = arith.constant 0 : index
    %c0_24 = arith.constant 0 : index
    %42 = vector.load %arg5[%c0_23, %c0_24] : memref<2x32xf32, #tpu.memory_space<vmem>>, vector<1x32xf32>
    %c1 = arith.constant 1 : index
    %c0_25 = arith.constant 0 : index
    %43 = vector.load %arg5[%c1, %c0_25] : memref<2x32xf32, #tpu.memory_space<vmem>>, vector<1x32xf32>
    %cst_26 = arith.constant dense<0.000000e+00> : vector<32xf32>
    %44 = vector.multi_reduction <add>, %41, %cst_26 [0] : vector<8x32xf32> to vector<32xf32>
    %45 = vector.shape_cast %44 : vector<32xf32> to vector<1x32xf32>
    %cst_27 = arith.constant 8.000000e+00 : f32
    %46 = vector.broadcast %cst_27 : f32 to vector<1x32xf32>
    %47 = arith.divf %45, %46 : vector<1x32xf32>
    %48 = vector.broadcast %47 : vector<1x32xf32> to vector<8x32xf32>
    %49 = arith.subf %41, %48 : vector<8x32xf32>
    %50 = arith.mulf %49, %49 : vector<8x32xf32>
    %cst_28 = arith.constant dense<0.000000e+00> : vector<32xf32>
    %51 = vector.multi_reduction <add>, %50, %cst_28 [0] : vector<8x32xf32> to vector<32xf32>
    %52 = vector.shape_cast %51 : vector<32xf32> to vector<1x32xf32>
    %cst_29 = arith.constant 8.000000e+00 : f32
    %53 = vector.broadcast %cst_29 : f32 to vector<1x32xf32>
    %54 = arith.divf %52, %53 : vector<1x32xf32>
    %55 = vector.broadcast %47 : vector<1x32xf32> to vector<8x32xf32>
    %56 = arith.subf %41, %55 : vector<8x32xf32>
    %cst_30 = arith.constant 9.99999974E-6 : f32
    %57 = vector.broadcast %cst_30 : f32 to vector<1x32xf32>
    %58 = arith.addf %54, %57 : vector<1x32xf32>
    %59 = math.rsqrt %58 : vector<1x32xf32>
    %60 = vector.broadcast %59 : vector<1x32xf32> to vector<8x32xf32>
    %61 = arith.mulf %56, %60 : vector<8x32xf32>
    %62 = vector.broadcast %42 : vector<1x32xf32> to vector<8x32xf32>
    %63 = arith.mulf %61, %62 : vector<8x32xf32>
    %64 = vector.broadcast %43 : vector<1x32xf32> to vector<8x32xf32>
    %65 = arith.addf %63, %64 : vector<8x32xf32>
    %cst_31 = arith.constant 0.000000e+00 : f32
    %66 = vector.broadcast %cst_31 : f32 to vector<8x32xf32>
    %67 = arith.cmpf ogt, %65, %66 : vector<8x32xf32>
    %cst_32 = arith.constant 0.00999999977 : f32
    %68 = vector.broadcast %cst_32 : f32 to vector<8x32xf32>
    %69 = arith.mulf %68, %65 : vector<8x32xf32>
    %70 = arith.select %67, %65, %69 : vector<8x32xi1>, vector<8x32xf32>
    %c0_33 = arith.constant 0 : index
    %c0_34 = arith.constant 0 : index
    %71 = vector.load %arg6[%c0_33, %c0_34] : memref<8x32xf32, #tpu.memory_space<vmem>>, vector<8x32xf32>
    tpu.vector_store %arg6[%c0_33, %c0_34], %70 {strides = array<i32>} : memref<8x32xf32, #tpu.memory_space<vmem>>, vector<8x32xf32>,
    return
  }
}

</mosaic_0001>

<llo_original>
// kernel: transformer_block.1
$region0: #{transformer_block.1}
  #allocation0 [shape = 'u32[]', space=smem, size = 0x4, offset = 0x4, fixed_abs, tag = 'smem constant byte address 0x4 - core index']
  #allocation1 [shape = 'u32[72,128]{1,0:T(1,128)}', space=vmem, size = 0x9000, scoped, tag = 'internal scratch']
  %s0 = inlined_call_operand.vmem [shape: f32[32,68], index: 0, kind: input, shape index: {}]
  %s1 = inlined_call_operand.vmem [shape: f32[32,32], index: 1, kind: input, shape index: {}]
  %s2 = inlined_call_operand.vmem [shape: f32[68,96], index: 2, kind: input, shape index: {}]
  %s3 = inlined_call_operand.vmem [shape: f32[128,32], index: 3, kind: input, shape index: {}]
  %s4 = inlined_call_operand.vmem [shape: f32[17,32], index: 4, kind: input, shape index: {}]
  %s5 = inlined_call_operand.vmem [shape: f32[2,32], index: 5, kind: input, shape index: {}]
  %s6 = inlined_call_operand.hbm [shape: f32[8,32], index: 6, kind: output, shape index: {}]
  %s7 = sld [smem:[#allocation0]]
  $region34: #{transformer_block.1} parent=0
    _
  %s9 = ssub.s32 1, %s7
  %s10 = scalar_select 0, %s9, %s7
  $region1: #{transformer_block.1} parent=0
    #allocation2 [shape = 'u8[4096]{0}', space=vmem, size = 0x1000, scoped, tag = 'output window, operand 0, single buffered']
    #allocation3 [shape = 's32[1]{0}', space=sflag, size = 0x4, scoped, tag = 'scoped memory for transformer_block.1']
    %11 = vsyncpa [#allocation3], 0
    // Predicated region
    $region2: #{transformer_block.1} parent=1 // pred_check
      _
    $region3: #{transformer_block.1} parent=1 // pred_check_branch
      %13 = sbr.rel (0) target = $region5
    $region4: #{transformer_block.1} parent=1 // pred_region
      _
    $region5: #{transformer_block.1} parent=1 // pred_fallthru
      _
    // Predicated region
    $region6: #{transformer_block.1} parent=1 // pred_check
      _
    $region7: #{transformer_block.1} parent=1 // pred_check_branch
      %15 = sbr.rel (0) target = $region9
    $region8: #{transformer_block.1} parent=1 // pred_region
      _
    $region9: #{transformer_block.1} parent=1 // pred_fallthru
      _
    // Predicated region
    $region10: #{transformer_block.1} parent=1 // pred_check
      _
    $region11: #{transformer_block.1} parent=1 // pred_check_branch
      %17 = sbr.rel (0) target = $region13
    $region12: #{transformer_block.1} parent=1 // pred_region
      _
    $region13: #{transformer_block.1} parent=1 // pred_fallthru
      _
    // Predicated region
    $region14: #{transformer_block.1} parent=1 // pred_check
      _
    $region15: #{transformer_block.1} parent=1 // pred_check_branch
      %19 = sbr.rel (0) target = $region17
    $region16: #{transformer_block.1} parent=1 // pred_region
      _
    $region17: #{transformer_block.1} parent=1 // pred_fallthru
      _
    // Predicated region
    $region18: #{transformer_block.1} parent=1 // pred_check
      _
    $region19: #{transformer_block.1} parent=1 // pred_check_branch
      %21 = sbr.rel (0) target = $region21
    $region20: #{transformer_block.1} parent=1 // pred_region
      _
    $region21: #{transformer_block.1} parent=1 // pred_fallthru
      _
    // Predicated region
    $region22: #{transformer_block.1} parent=1 // pred_check
      _
    $region23: #{transformer_block.1} parent=1 // pred_check_branch
      %23 = sbr.rel (0) target = $region25
    $region24: #{transformer_block.1} parent=1 // pred_region
      _
    $region25: #{transformer_block.1} parent=1 // pred_fallthru
      _
    %v24 = vld [vmem:[%s0] sm:$0xff]
    %v25 = vld [vmem:[%s0 + $0x8] sm:$0xff]
    %v26 = vld [vmem:[%s0 + $0x10] sm:$0xff]
    %v27 = vld [vmem:[%s0 + $0x18] sm:$0xff]
    %v28 = vld [vmem:[%s1] sm:$0xff]
    %v29 = vld [vmem:[%s1 + $0x8] sm:$0xff]
    %v30 = vld [vmem:[%s1 + $0x10] sm:$0xff]
    %v31 = vld [vmem:[%s1 + $0x18] sm:$0xff]
    %v32 = vld [vmem:[%s2] sm:$0xff]
    %v33 = vld [vmem:[%s2 + $0x8] sm:$0xff]
    %v34 = vld [vmem:[%s2 + $0x10] sm:$0xff]
    %v35 = vld [vmem:[%s2 + $0x18] sm:$0xff]
    %v36 = vld [vmem:[%s2 + $0x20] sm:$0xff]
    %v37 = vld [vmem:[%s2 + $0x28] sm:$0xff]
    %v38 = vld [vmem:[%s2 + $0x30] sm:$0xff]
    %v39 = vld [vmem:[%s2 + $0x38] sm:$0xff]
    %v40 = vld [vmem:[%s2 + $0x40] sm:$0xf]
    %vm41 = vcmask 556032
    %v43 = vsel %vm41, %v24, 0
    %v46 = vsel %vm41, %v25, 0
    %v49 = vsel %vm41, %v26, 0
    %v52 = vsel %vm41, %v27, 0
    %vm54 = vcmask 1043456
    %v56 = vsel %vm54, %v40, 0
    %58 = vmatpush.msra.mxu0 0.0
    %59 = vmatpush.msra.mxu0 0.0
    %60 = vmatpush.msra.mxu0 0.0
    %61 = vmatpush.msra.mxu0 0.0
    %62 = vmatpush.msra.mxu0 0.0
    %63 = vmatpush.msra.mxu0 0.0
    %64 = vmatpush.msra.mxu0 0.0
    %65 = vmatpush.msra.mxu0 %v56
    %66 = vmatpush.msra.mxu0 %v39
    %67 = vmatpush.msra.mxu0 %v38
    %68 = vmatpush.msra.mxu0 %v37
    %69 = vmatpush.msra.mxu0 %v36
    %70 = vmatpush.msra.mxu0 %v35
    %71 = vmatpush.msra.mxu0 %v34
    %72 = vmatpush.msra.mxu0 %v33
    %73 = vmatpush.msra.mxu0 %v32
    %74 = vmatmul.f32.gmra.mxu0 %v43
    %v75 = vpop.f32.mrf.mxu0
    %v76 = vadd.f32 0.0, %v75
    %77 = vmatmul.f32.gmra.mxu0 %v46
    %v78 = vpop.f32.mrf.mxu0
    %v79 = vadd.f32 0.0, %v78
    %80 = vmatmul.f32.gmra.mxu0 %v49
    %v81 = vpop.f32.mrf.mxu0
    %v82 = vadd.f32 0.0, %v81
    %83 = vmatmul.f32.gmra.mxu0 %v52
    %v84 = vpop.f32.mrf.mxu0
    %v85 = vadd.f32 0.0, %v84
    %86 = vdwg.mxu0
    %91 = vrot.lane.b32.xlu0 %v76, 96
    %v92 = vpop.permute.xlu0 %91
    %93 = vrot.lane.b32.xlu0 %v79, 96
    %v94 = vpop.permute.xlu0 %93
    %95 = vrot.lane.b32.xlu0 %v82, 96
    %v96 = vpop.permute.xlu0 %95
    %97 = vrot.lane.b32.xlu0 %v85, 96
    %v98 = vpop.permute.xlu0 %97
    %vm99 = vcmask 261120
    %v100 = vsel %vm99, %v76, 0
    %v102 = vsel %vm99, %v79, 0
    %v104 = vsel %vm99, %v82, 0
    %v106 = vsel %vm99, %v85, 0
    %v108 = vsel %vm99, %v92, 0
    %v110 = vsel %vm99, %v94, 0
    %v112 = vsel %vm99, %v96, 0
    %v114 = vsel %vm99, %v98, 0
    %116 = vmatpush.xpose.msra.mxu0 0.0
    %117 = vmatpush.xpose.msra.mxu0 0.0
    %118 = vmatpush.xpose.msra.mxu0 0.0
    %119 = vmatpush.xpose.msra.mxu0 0.0
    %120 = vmatpush.xpose.msra.mxu0 0.0
    %121 = vmatpush.xpose.msra.mxu0 0.0
    %122 = vmatpush.xpose.msra.mxu0 0.0
    %123 = vmatpush.xpose.msra.mxu0 0.0
    %124 = vmatpush.xpose.msra.mxu0 0.0
    %125 = vmatpush.xpose.msra.mxu0 0.0
    %126 = vmatpush.xpose.msra.mxu0 0.0
    %127 = vmatpush.xpose.msra.mxu0 0.0
    %128 = vmatpush.xpose.msra.mxu0 %v114
    %129 = vmatpush.xpose.msra.mxu0 %v112
    %130 = vmatpush.xpose.msra.mxu0 %v110
    %131 = vmatpush.xpose.msra.mxu0 %v108
    %132 = vmatmul.f32.gmra.mxu0 %v100
    %v133 = vpop.f32.mrf.mxu0
    %v134 = vadd.f32 0.0, %v133
    %135 = vmatmul.f32.gmra.mxu0 %v102
    %v136 = vpop.f32.mrf.mxu0
    %v137 = vadd.f32 0.0, %v136
    %138 = vmatmul.f32.gmra.mxu0 %v104
    %v139 = vpop.f32.mrf.mxu0
    %v140 = vadd.f32 0.0, %v139
    %141 = vmatmul.f32.gmra.mxu0 %v106
    %v142 = vpop.f32.mrf.mxu0
    %v143 = vadd.f32 0.0, %v142
    %144 = vdwg.mxu0
    %v145 = vmul.f32 %v134, 0.17677669
    %v146 = vmul.f32 %v137, 0.17677669
    %v147 = vmul.f32 %v140, 0.17677669
    %v148 = vmul.f32 %v143, 0.17677669
    %v149 = vadd.f32 %v145, %v28
    %v150 = vadd.f32 %v146, %v29
    %v151 = vadd.f32 %v147, %v30
    %v152 = vadd.f32 %v148, %v31
    %v153 = vsel %vm99, %v149, -inf
    %154 = vmax.xlane.f32.xlu0 %v153
    %v155 = vpop.xlane.xlu0 %154
    %v156 = vsel %vm99, %v150, -inf
    %157 = vmax.xlane.f32.xlu0 %v156
    %v158 = vpop.xlane.xlu0 %157
    %v159 = vsel %vm99, %v151, -inf
    %160 = vmax.xlane.f32.xlu0 %v159
    %v161 = vpop.xlane.xlu0 %160
    %v162 = vsel %vm99, %v152, -inf
    %163 = vmax.xlane.f32.xlu0 %v162
    %v164 = vpop.xlane.xlu0 %163
    %v165 = vsub.f32 %v149, %v155
    %v166 = vsub.f32 %v150, %v158
    %v167 = vsub.f32 %v151, %v161
    %v168 = vsub.f32 %v152, %v164
    %v169 = vmul.f32 %v165, 1.442695
    %v170 = vpow.pop %v169
    %v171 = vmul.f32 %v166, 1.442695
    %v172 = vpow.pop %v171
    %v173 = vmul.f32 %v167, 1.442695
    %v174 = vpow.pop %v173
    %v175 = vmul.f32 %v168, 1.442695
    %v176 = vpow.pop %v175
    %v177 = vsel %vm99, %v170, 0.0
    %178 = vadd.xlane.f32.xlu0 %v177
    %v179 = vpop.xlane.xlu0 %178
    %v180 = vsel %vm99, %v172, 0.0
    %181 = vadd.xlane.f32.xlu0 %v180
    %v182 = vpop.xlane.xlu0 %181
    %v183 = vsel %vm99, %v174, 0.0
    %184 = vadd.xlane.f32.xlu0 %v183
    %v185 = vpop.xlane.xlu0 %184
    %v186 = vsel %vm99, %v176, 0.0
    %187 = vadd.xlane.f32.xlu0 %v186
    %v188 = vpop.xlane.xlu0 %187
    %v189 = vmax.f32 %v179, 1e-30
    %v190 = vmax.f32 %v182, 1e-30
    %v191 = vmax.f32 %v185, 1e-30
    %v192 = vmax.f32 %v188, 1e-30
    %v193 = vrcp.pop %v189
    %v194 = vmul.f32 %v189, %v193
    %v195 = vsub.f32 1.0, %v194
    %v196 = vmul.f32 %v193, %v195
    %v197 = vadd.f32 %v193, %v196
    %vm198 = vweird.f32 %v189
    %vm199 = vweird.f32 %v193
    %vm200 = vmor %vm198, %vm199
    %v201 = vsel %vm200, %v193, %v197
    %v202 = vand.u32 2147483647, %v189
    %vm203 = vcmp.eq.f32.partialorder %v202, 8.507059e+37
    %v204 = vand.u32 %v189, 2147483648
    %v205 = vor.u32 1.1754944e-38, %v204
    %v206 = vsel %vm203, %v205, %v201
    %v207 = vmul.f32 %v170, %v206
    %v208 = vrcp.pop %v190
    %v209 = vmul.f32 %v190, %v208
    %v210 = vsub.f32 1.0, %v209
    %v211 = vmul.f32 %v208, %v210
    %v212 = vadd.f32 %v208, %v211
    %vm213 = vweird.f32 %v190
    %vm214 = vweird.f32 %v208
    %vm215 = vmor %vm213, %vm214
    %v216 = vsel %vm215, %v208, %v212
    %v217 = vand.u32 2147483647, %v190
    %vm218 = vcmp.eq.f32.partialorder %v217, 8.507059e+37
    %v219 = vand.u32 %v190, 2147483648
    %v220 = vor.u32 1.1754944e-38, %v219
    %v221 = vsel %vm218, %v220, %v216
    %v222 = vmul.f32 %v172, %v221
    %v223 = vrcp.pop %v191
    %v224 = vmul.f32 %v191, %v223
    %v225 = vsub.f32 1.0, %v224
    %v226 = vmul.f32 %v223, %v225
    %v227 = vadd.f32 %v223, %v226
    %vm228 = vweird.f32 %v191
    %vm229 = vweird.f32 %v223
    %vm230 = vmor %vm228, %vm229
    %v231 = vsel %vm230, %v223, %v227
    %v232 = vand.u32 2147483647, %v191
    %vm233 = vcmp.eq.f32.partialorder %v232, 8.507059e+37
    %v234 = vand.u32 %v191, 2147483648
    %v235 = vor.u32 1.1754944e-38, %v234
    %v236 = vsel %vm233, %v235, %v231
    %v237 = vmul.f32 %v174, %v236
    %v238 = vrcp.pop %v192
    %v239 = vmul.f32 %v192, %v238
    %v240 = vsub.f32 1.0, %v239
    %v241 = vmul.f32 %v238, %v240
    %v242 = vadd.f32 %v238, %v241
    %vm243 = vweird.f32 %v192
    %vm244 = vweird.f32 %v238
    %vm245 = vmor %vm243, %vm244
    %v246 = vsel %vm245, %v238, %v242
    %v247 = vand.u32 2147483647, %v192
    %vm248 = vcmp.eq.f32.partialorder %v247, 8.507059e+37
    %v249 = vand.u32 %v192, 2147483648
    %v250 = vor.u32 1.1754944e-38, %v249
    %v251 = vsel %vm248, %v250, %v246
    %v252 = vmul.f32 %v176, %v251
    %253 = vrot.lane.b32.xlu0 %v76, 64
    %v254 = vpop.permute.xlu0 %253
    %255 = vrot.lane.b32.xlu0 %v79, 64
    %v256 = vpop.permute.xlu0 %255
    %257 = vrot.lane.b32.xlu0 %v82, 64
    %v258 = vpop.permute.xlu0 %257
    %259 = vrot.lane.b32.xlu0 %v85, 64
    %v260 = vpop.permute.xlu0 %259
    %v266 = vsel %vm99, %v207, 0
    %v269 = vsel %vm99, %v222, 0
    %v272 = vsel %vm99, %v237, 0
    %v275 = vsel %vm99, %v252, 0
    %277 = vmatpush.msra.mxu0 0.0
    %278 = vmatpush.msra.mxu0 0.0
    %279 = vmatpush.msra.mxu0 0.0
    %280 = vmatpush.msra.mxu0 0.0
    %281 = vmatpush.msra.mxu0 0.0
    %282 = vmatpush.msra.mxu0 0.0
    %283 = vmatpush.msra.mxu0 0.0
    %284 = vmatpush.msra.mxu0 0.0
    %285 = vmatpush.msra.mxu0 0.0
    %286 = vmatpush.msra.mxu0 0.0
    %287 = vmatpush.msra.mxu0 0.0
    %288 = vmatpush.msra.mxu0 0.0
    %289 = vmatpush.msra.mxu0 %v260
    %290 = vmatpush.msra.mxu0 %v258
    %291 = vmatpush.msra.mxu0 %v256
    %292 = vmatpush.msra.mxu0 %v254
    %293 = vmatmul.f32.gmra.mxu0 %v266
    %v294 = vpop.f32.mrf.mxu0
    %v295 = vadd.f32 0.0, %v294
    %296 = vmatmul.f32.gmra.mxu0 %v269
    %v297 = vpop.f32.mrf.mxu0
    %v298 = vadd.f32 0.0, %v297
    %299 = vmatmul.f32.gmra.mxu0 %v272
    %v300 = vpop.f32.mrf.mxu0
    %v301 = vadd.f32 0.0, %v300
    %302 = vmatmul.f32.gmra.mxu0 %v275
    %v303 = vpop.f32.mrf.mxu0
    %v304 = vadd.f32 0.0, %v303
    %305 = vdwg.mxu0
    %v306 = vld [vmem:[%s4] sm:$0xff]
    %v307 = vld [vmem:[%s4 + $0x8] sm:$0xff]
    %v308 = vld [vmem:[%s4 + $0x10] sm:$0x1]
    %v309 = vld [vmem:[%s3] sm:$0xff]
    %v310 = vld [vmem:[%s3 + $0x8] sm:$0xff]
    %v311 = vld [vmem:[%s3 + $0x10] sm:$0xff]
    %v312 = vld [vmem:[%s3 + $0x18] sm:$0xff]
    %v314 = vsel %vm99, %v295, 0
    %316 = vmatpush.msra.mxu0 0.0
    %317 = vmatpush.msra.mxu0 0.0
    %318 = vmatpush.msra.mxu0 0.0
    %319 = vmatpush.msra.mxu0 0.0
    %320 = vmatpush.msra.mxu0 0.0
    %321 = vmatpush.msra.mxu0 0.0
    %322 = vmatpush.msra.mxu0 0.0
    %323 = vmatpush.msra.mxu0 0.0
    %324 = vmatpush.msra.mxu0 0.0
    %325 = vmatpush.msra.mxu0 0.0
    %326 = vmatpush.msra.mxu0 0.0
    %327 = vmatpush.msra.mxu0 0.0
    %328 = vmatpush.msra.mxu0 %v312
    %329 = vmatpush.msra.mxu0 %v311
    %330 = vmatpush.msra.mxu0 %v310
    %331 = vmatpush.msra.mxu0 %v309
    %332 = vmatmul.f32.gmra.mxu0 %v314
    %v333 = vpop.f32.mrf.mxu0
    %v334 = vadd.f32 0.0, %v333
    %335 = vdwg.mxu0
    %vm336 = vcmask 138240
    %v337 = vsel %vm336, %v24, 0
    %vm339 = vcmask 1040384
    %v341 = vsel %vm339, %v308, 0
    %343 = vmatpush.msra.mxu0 0.0
    %344 = vmatpush.msra.mxu0 0.0
    %345 = vmatpush.msra.mxu0 0.0
    %346 = vmatpush.msra.mxu0 0.0
    %347 = vmatpush.msra.mxu0 0.0
    %348 = vmatpush.msra.mxu0 0.0
    %349 = vmatpush.msra.mxu0 0.0
    %350 = vmatpush.msra.mxu0 0.0
    %351 = vmatpush.msra.mxu0 0.0
    %352 = vmatpush.msra.mxu0 0.0
    %353 = vmatpush.msra.mxu0 0.0
    %354 = vmatpush.msra.mxu0 0.0
    %355 = vmatpush.msra.mxu0 0.0
    %356 = vmatpush.msra.mxu0 %v341
    %357 = vmatpush.msra.mxu0 %v307
    %358 = vmatpush.msra.mxu0 %v306
    %359 = vmatmul.f32.gmra.mxu0 %v337
    %v360 = vpop.f32.mrf.mxu0
    %v361 = vadd.f32 %v334, %v360
    %362 = vdwg.mxu0
    %v363 = vld [vmem:[%s3 + $0x20] sm:$0xff]
    %v364 = vld [vmem:[%s3 + $0x28] sm:$0xff]
    %v365 = vld [vmem:[%s3 + $0x30] sm:$0xff]
    %v366 = vld [vmem:[%s3 + $0x38] sm:$0xff]
    %v368 = vsel %vm99, %v298, 0
    %370 = vmatpush.msra.mxu0 0.0
    %371 = vmatpush.msra.mxu0 0.0
    %372 = vmatpush.msra.mxu0 0.0
    %373 = vmatpush.msra.mxu0 0.0
    %374 = vmatpush.msra.mxu0 0.0
    %375 = vmatpush.msra.mxu0 0.0
    %376 = vmatpush.msra.mxu0 0.0
    %377 = vmatpush.msra.mxu0 0.0
    %378 = vmatpush.msra.mxu0 0.0
    %379 = vmatpush.msra.mxu0 0.0
    %380 = vmatpush.msra.mxu0 0.0
    %381 = vmatpush.msra.mxu0 0.0
    %382 = vmatpush.msra.mxu0 %v366
    %383 = vmatpush.msra.mxu0 %v365
    %384 = vmatpush.msra.mxu0 %v364
    %385 = vmatpush.msra.mxu0 %v363
    %386 = vmatmul.f32.gmra.mxu0 %v368
    %v387 = vpop.f32.mrf.mxu0
    %v388 = vadd.f32 0.0, %v387
    %389 = vdwg.mxu0
    %v390 = vadd.f32 %v361, %v388
    %v391 = vld [vmem:[%s3 + $0x40] sm:$0xff]
    %v392 = vld [vmem:[%s3 + $0x48] sm:$0xff]
    %v393 = vld [vmem:[%s3 + $0x50] sm:$0xff]
    %v394 = vld [vmem:[%s3 + $0x58] sm:$0xff]
    %v396 = vsel %vm99, %v301, 0
    %398 = vmatpush.msra.mxu0 0.0
    %399 = vmatpush.msra.mxu0 0.0
    %400 = vmatpush.msra.mxu0 0.0
    %401 = vmatpush.msra.mxu0 0.0
    %402 = vmatpush.msra.mxu0 0.0
    %403 = vmatpush.msra.mxu0 0.0
    %404 = vmatpush.msra.mxu0 0.0
    %405 = vmatpush.msra.mxu0 0.0
    %406 = vmatpush.msra.mxu0 0.0
    %407 = vmatpush.msra.mxu0 0.0
    %408 = vmatpush.msra.mxu0 0.0
    %409 = vmatpush.msra.mxu0 0.0
    %410 = vmatpush.msra.mxu0 %v394
    %411 = vmatpush.msra.mxu0 %v393
    %412 = vmatpush.msra.mxu0 %v392
    %413 = vmatpush.msra.mxu0 %v391
    %414 = vmatmul.f32.gmra.mxu0 %v396
    %v415 = vpop.f32.mrf.mxu0
    %v416 = vadd.f32 0.0, %v415
    %417 = vdwg.mxu0
    %v418 = vadd.f32 %v390, %v416
    %v419 = vld [vmem:[%s3 + $0x60] sm:$0xff]
    %v420 = vld [vmem:[%s3 + $0x68] sm:$0xff]
    %v421 = vld [vmem:[%s3 + $0x70] sm:$0xff]
    %v422 = vld [vmem:[%s3 + $0x78] sm:$0xff]
    %v424 = vsel %vm99, %v304, 0
    %426 = vmatpush.msra.mxu0 0.0
    %427 = vmatpush.msra.mxu0 0.0
    %428 = vmatpush.msra.mxu0 0.0
    %429 = vmatpush.msra.mxu0 0.0
    %430 = vmatpush.msra.mxu0 0.0
    %431 = vmatpush.msra.mxu0 0.0
    %432 = vmatpush.msra.mxu0 0.0
    %433 = vmatpush.msra.mxu0 0.0
    %434 = vmatpush.msra.mxu0 0.0
    %435 = vmatpush.msra.mxu0 0.0
    %436 = vmatpush.msra.mxu0 0.0
    %437 = vmatpush.msra.mxu0 0.0
    %438 = vmatpush.msra.mxu0 %v422
    %439 = vmatpush.msra.mxu0 %v421
    %440 = vmatpush.msra.mxu0 %v420
    %441 = vmatpush.msra.mxu0 %v419
    %442 = vmatmul.f32.gmra.mxu0 %v424
    %v443 = vpop.f32.mrf.mxu0
    %v444 = vadd.f32 0.0, %v443
    %445 = vdwg.mxu0
    %v446 = vadd.f32 %v418, %v444
    %v447 = vld [vmem:[%s5] sm:$0x1]
    %v448 = vld [vmem:[%s5 + $0x1] sm:$0x1]
    %v449 = vsel %vm99, %v446, 0.0
    %v450 = vrot.slane %v449, 4
    %v451 = vadd.f32 %v449, %v450
    %v452 = vrot.slane %v451, 2
    %v453 = vadd.f32 %v451, %v452
    %v454 = vrot.slane %v453, 1
    %v455 = vadd.f32 %v453, %v454
    %v456 = vrcp.pop 8.0
    %v457 = vmul.f32 8.0, %v456
    %v458 = vsub.f32 1.0, %v457
    %v459 = vmul.f32 %v456, %v458
    %v460 = vadd.f32 %v456, %v459
    %vm461 = vweird.f32 %v456
    %v462 = vsel %vm461, %v456, %v460
    %v463 = vmul.f32 %v455, %v462
    %v464 = vsub.f32 %v446, %v463
    %v465 = vmul.f32 %v464, %v464
    %v466 = vsel %vm99, %v465, 0.0
    %v467 = vrot.slane %v466, 4
    %v468 = vadd.f32 %v466, %v467
    %v469 = vrot.slane %v468, 2
    %v470 = vadd.f32 %v468, %v469
    %v471 = vrot.slane %v470, 1
    %v472 = vadd.f32 %v470, %v471
    %v473 = vmul.f32 %v472, %v462
    %v474 = vadd.f32 %v473, 1e-05
    %v475 = vrsqrt.pop %v474
    %v476 = vmul.f32 %v475, %v474
    %v477 = vmul.f32 %v476, %v475
    %v478 = vmul.f32 0.5, %v477
    %v479 = vsub.f32 1.5, %v478
    %v480 = vmul.f32 %v475, %v479
    %vm481 = vweird.f32 %v474
    %vm482 = vweird.f32 %v475
    %vm483 = vmor %vm481, %vm482
    %v484 = vsel %vm483, %v475, %v480
    %v485 = vmul.f32 %v464, %v484
    %v486 = vperm.slane %v447, 0
    %v487 = vmul.f32 %v485, %v486
    %v488 = vperm.slane %v448, 0
    %v489 = vadd.f32 %v487, %v488
    %vm490 = vcmp.gt.f32.partialorder %v489, 0.0
    %v491 = vmul.f32 %v489, 0.01
    %v492 = vsel %vm490, %v489, %v491
    %493 = vst.msk [vmem:[#allocation2] sm:$0xff] %vm99, %v492
    // Predicated region
    $region26: #{transformer_block.1} parent=1 // pred_check
      _
    $region27: #{transformer_block.1} parent=1 // pred_check_branch
      %495 = sbr.rel (0) target = $region29
    $region28: #{transformer_block.1} parent=1 // pred_region
      %497 = vsyncadd [#allocation3], 0
      %s499 = sshll.u32 [#allocation2], 4
      %s500 = int_to_ptr.vmem [resolvable:$true] %s499
      %s501 = sshll.u32 %s6, 4
      %s502 = int_to_ptr.hbm [resolvable:$true] %s501
      %504 = dma.vmem_to_hbm [thread:$0]  %s500, 128, %s502, [#allocation3]
    $region29: #{transformer_block.1} parent=1 // pred_fallthru
      _
    // Predicated region
    $region30: #{transformer_block.1} parent=1 // pred_check
      _
    $region31: #{transformer_block.1} parent=1 // pred_check_branch
      %506 = sbr.rel (0) target = $region33
    $region32: #{transformer_block.1} parent=1 // pred_region
      %508 = dma.done [#allocation3], 128
    $region33: #{transformer_block.1} parent=1 // pred_fallthru
      _
    %509 = vsyncpa [#allocation3], 1

</llo_original>
